<compile_context>
chip_gen: v6e
topology: v6e:2x2x1
jax: 0.10.0
libtpu: 0.0.40
codegen_flags: <defaults>
</compile_context>

<pallas_src>
import functools

import jax
import jax.numpy as jnp
from jax.experimental import pallas as pl
from jax.experimental.pallas import tpu as pltpu


def _round_up(n, m):
    return (n + m - 1) // m * m


def _linear_kernel(x_ref, w_ref, b_ref, o_ref, acc_ref):
    """Computes one (tm, tn) output tile; grid axis 2 reduces over K."""
    k = pl.program_id(2)

    @pl.when(k == 0)
    def _():
        acc_ref[...] = jnp.zeros_like(acc_ref)

    acc_ref[...] += jnp.dot(
        x_ref[...], w_ref[...], preferred_element_type=jnp.float32
    )

    @pl.when(k == pl.num_programs(2) - 1)
    def _():
        # Bias add in f32, then one lane-dense store of the whole tile.
        o_ref[...] = (acc_ref[...] + b_ref[...]).astype(o_ref.dtype)


def _pallas_linear(x, weight_t, bias2d, *, tm=256, tn=512, tk=512):
    """y = x @ weight_t + bias with bf16 operands and f32 accumulation.

    x:        (B, D)       float
    weight_t: (D, total)   float   (transposed nn.Linear weight)
    bias2d:   (1, total)   float32
    returns   (B, total)   float32
    """
    B, D = x.shape
    total = weight_t.shape[1]

    # Clamp tile sizes to the (aligned) problem, then pad every dim to a whole
    # number of tiles so all BlockSpecs are sublane/lane dense (8, 128).
    tm = min(tm, _round_up(B, 8))
    tn = min(tn, _round_up(total, 128))
    tk = min(tk, _round_up(D, 128))
    m_pad = _round_up(B, tm)
    n_pad = _round_up(total, tn)
    k_pad = _round_up(D, tk)

    # bf16 operands (MXU native rate on v5e/v6e/v7x); bias / accum stay f32.
    x_p = jnp.pad(x.astype(jnp.bfloat16), ((0, m_pad - B), (0, k_pad - D)))
    w_p = jnp.pad(
        weight_t.astype(jnp.bfloat16), ((0, k_pad - D), (0, n_pad - total))
    )
    b_p = jnp.pad(bias2d.astype(jnp.float32), ((0, 0), (0, n_pad - total)))

    grid = (m_pad // tm, n_pad // tn, k_pad // tk)

    cost = pl.CostEstimate(
        flops=2 * m_pad * k_pad * n_pad,
        transcendentals=0,
        bytes_accessed=(
            x_p.size * 2 + w_p.size * 2 + b_p.size * 4 + m_pad * n_pad * 4
        ),
    )

    y_pad = pl.pallas_call(
        _linear_kernel,
        out_shape=jax.ShapeDtypeStruct((m_pad, n_pad), jnp.float32),
        grid_spec=pltpu.PrefetchScalarGridSpec(
            num_scalar_prefetch=0,
            grid=grid,
            in_specs=[
                pl.BlockSpec((tm, tk), lambda i, j, k: (i, k)),
                pl.BlockSpec((tk, tn), lambda i, j, k: (k, j)),
                # Bias depends only on the N tile: not re-DMA'd per K step.
                pl.BlockSpec((1, tn), lambda i, j, k: (0, j)),
            ],
            out_specs=pl.BlockSpec((tm, tn), lambda i, j, k: (i, j)),
            scratch_shapes=[pltpu.VMEM((tm, tn), jnp.float32)],
        ),
        compiler_params=pltpu.CompilerParams(
            # M / N parallel (megacore sharding on v7x), K reduction arbitrary.
            dimension_semantics=("parallel", "parallel", "arbitrary"),
            vmem_limit_bytes=48 * 1024 * 1024,
        ),
        cost_estimate=cost,
    )(x_p, w_p, b_p)

    # Un-pad (static slice, pure glue).
    return y_pad[:B, :total]


def multi_head_classifier_forward(x, weight_t, bias, output_dims, *,
                                  use_pallas=True):
    """MultiHeadClassifier.forward: Linear followed by torch.split(dim=1).

    Returns a tuple of arrays with shapes (B, d_i) for d_i in output_dims.
    """
    total = weight_t.shape[1]
    assert sum(output_dims) == total
    bias2d = bias.reshape(1, total).astype(jnp.float32)

    if use_pallas:
        y = _pallas_linear(x, weight_t, bias2d)
    else:
        # For tiny problems the ~0.35 us per-step pallas_call overhead dwarfs
        # the matmul; let XLA fuse the linear into the surrounding graph.
        y = jnp.dot(x, weight_t, preferred_element_type=jnp.float32) + bias2d

    # torch.split(y, output_dims, dim=1) equivalent: static slices.
    outs = []
    off = 0
    for d in output_dims:
        outs.append(y[:, off:off + d])
        off += d
    return tuple(outs)


if __name__ == "__main__":
    # Small shapes consistent with the module.
    batch = 8
    input_dim = 32
    output_dims = (3, 5, 8)          # sum = 16
    total_out = sum(output_dims)

    key = jax.random.PRNGKey(0)
    kx, kw, kb = jax.random.split(key, 3)

    x = jax.random.normal(kx, (batch, input_dim), dtype=jnp.float32)
    # nn.Linear weight is (out, in) in PyTorch; keep it transposed (in, out).
    weight = jax.random.normal(kw, (total_out, input_dim), dtype=jnp.float32) * 0.1
    bias = jax.random.normal(kb, (total_out,), dtype=jnp.float32) * 0.1
    weight_t = weight.T                      # (input_dim, total_out)

    fwd = jax.jit(
        functools.partial(multi_head_classifier_forward,
                          output_dims=output_dims, use_pallas=True)
    )
    outs = fwd(x, weight_t, bias)
    outs = jax.block_until_ready(outs)

    # Reference: same bf16-operand / f32-accumulate math via plain XLA.
    ref_bf16 = (
        jnp.dot(x.astype(jnp.bfloat16), weight_t.astype(jnp.bfloat16),
                preferred_element_type=jnp.float32)
        + bias.reshape(1, total_out)
    )
    ref_f32 = x @ weight_t + bias.reshape(1, total_out)

    off = 0
    for d, o in zip(output_dims, outs):
        assert o.shape == (batch, d), (o.shape, (batch, d))
        assert o.dtype == jnp.float32
        assert jnp.allclose(o, ref_bf16[:, off:off + d], atol=1e-2, rtol=1e-2)
        # Loose check against the exact f32 Linear (bf16 operand rounding).
        assert jnp.allclose(o, ref_f32[:, off:off + d], atol=5e-2, rtol=5e-2)
        off += d

    print("KERNEL_OK")
</pallas_src>

<mosaic_0001>
module attributes {stable_mosaic.version = 11 : i64} {
  func.func @_linear_kernel(%arg0: i32, %arg1: i32, %arg2: i32, %arg3: memref<8x128xbf16, #tpu.memory_space<vmem>>, %arg4: memref<128x128xbf16, #tpu.memory_space<vmem>>, %arg5: memref<1x128xf32, #tpu.memory_space<vmem>>, %arg6: memref<8x128xf32, #tpu.memory_space<vmem>>, %arg7: memref<8x128xf32, #tpu.memory_space<vmem>>) attributes {dimension_semantics = [#tpu.dimension_semantics<parallel>, #tpu.dimension_semantics<parallel>, #tpu.dimension_semantics<arbitrary>], iteration_bounds = array<i64: 1, 1, 1>, scalar_prefetch = 0 : i64, scratch_operands = 1 : i64, tpu.core_type = #tpu.core_type<tc>, window_params = [{transform_indices = @transform_0, window_bounds = array<i64: 8, 128>}, {transform_indices = @transform_1, window_bounds = array<i64: 128, 128>}, {transform_indices = @transform_2, window_bounds = array<i64: 1, 128>}, {transform_indices = @transform_3, window_bounds = array<i64: 8, 128>}]} {
    %c0_i32 = arith.constant 0 : i32
    %0 = arith.cmpi eq, %arg2, %c0_i32 : i32
    %1 = arith.extui %0 : i1 to i32
    %c0_i32_0 = arith.constant 0 : i32
    %2 = arith.cmpi ne, %1, %c0_i32_0 : i32
    scf.if %2 {
      %cst_10 = arith.constant 0.000000e+00 : f32
      %12 = vector.broadcast %cst_10 : f32 to vector<8x128xf32>
      %c0_11 = arith.constant 0 : index
      %c0_12 = arith.constant 0 : index
      %13 = vector.load %arg7[%c0_11, %c0_12] : memref<8x128xf32, #tpu.memory_space<vmem>>, vector<8x128xf32>
      tpu.vector_store %arg7[%c0_11, %c0_12], %12 {strides = array<i32>} : memref<8x128xf32, #tpu.memory_space<vmem>>, vector<8x128xf32>,
    } else {
    }
    %c0 = arith.constant 0 : index
    %c0_1 = arith.constant 0 : index
    %3 = vector.load %arg7[%c0, %c0_1] : memref<8x128xf32, #tpu.memory_space<vmem>>, vector<8x128xf32>
    %c0_2 = arith.constant 0 : index
    %c0_3 = arith.constant 0 : index
    %4 = vector.load %arg3[%c0_2, %c0_3] : memref<8x128xbf16, #tpu.memory_space<vmem>>, vector<8x128xbf16>
    %c0_4 = arith.constant 0 : index
    %c0_5 = arith.constant 0 : index
    %5 = vector.load %arg4[%c0_4, %c0_5] : memref<128x128xbf16, #tpu.memory_space<vmem>>, vector<128x128xbf16>
    %cst = arith.constant dense<0.000000e+00> : vector<8x128xf32>
    %6 = tpu.matmul %4, %5, %cst {dimension_numbers = #tpu.dot_dimension_numbers<[1], [0], [0], [1], [0, 0, 1, 1], [], []>} : vector<8x128xbf16>, vector<128x128xbf16>, vector<8x128xf32> -> vector<8x128xf32>
    %7 = arith.addf %3, %6 : vector<8x128xf32>
    %c0_6 = arith.constant 0 : index
    %c0_7 = arith.constant 0 : index
    %8 = vector.load %arg7[%c0_6, %c0_7] : memref<8x128xf32, #tpu.memory_space<vmem>>, vector<8x128xf32>
    tpu.vector_store %arg7[%c0_6, %c0_7], %7 {strides = array<i32>} : memref<8x128xf32, #tpu.memory_space<vmem>>, vector<8x128xf32>,
    %c0_i32_8 = arith.constant 0 : i32
    %9 = arith.cmpi eq, %arg2, %c0_i32_8 : i32
    %10 = arith.extui %9 : i1 to i32
    %c0_i32_9 = arith.constant 0 : i32
    %11 = arith.cmpi ne, %10, %c0_i32_9 : i32
    scf.if %11 {
      %c0_10 = arith.constant 0 : index
      %c0_11 = arith.constant 0 : index
      %12 = vector.load %arg7[%c0_10, %c0_11] : memref<8x128xf32, #tpu.memory_space<vmem>>, vector<8x128xf32>
      %c0_12 = arith.constant 0 : index
      %c0_13 = arith.constant 0 : index
      %13 = vector.load %arg5[%c0_12, %c0_13] : memref<1x128xf32, #tpu.memory_space<vmem>>, vector<1x128xf32>
      %14 = vector.broadcast %13 : vector<1x128xf32> to vector<8x128xf32>
      %15 = arith.addf %12, %14 : vector<8x128xf32>
      %c0_14 = arith.constant 0 : index
      %c0_15 = arith.constant 0 : index
      %16 = vector.load %arg6[%c0_14, %c0_15] : memref<8x128xf32, #tpu.memory_space<vmem>>, vector<8x128xf32>
      tpu.vector_store %arg6[%c0_14, %c0_15], %15 {strides = array<i32>} : memref<8x128xf32, #tpu.memory_space<vmem>>, vector<8x128xf32>,
    } else {
    }
    return
  }
  func.func @transform_0(%arg0: i32, %arg1: i32, %arg2: i32) -> (i32, i32) {
    %c0_i32 = arith.constant 0 : i32
    return %arg0, %arg2 : i32, i32
  }
  func.func @transform_1(%arg0: i32, %arg1: i32, %arg2: i32) -> (i32, i32) {
    %c0_i32 = arith.constant 0 : i32
    return %arg2, %arg1 : i32, i32
  }
  func.func @transform_2(%arg0: i32, %arg1: i32, %arg2: i32) -> (i32, i32) {
    %c0_i32 = arith.constant 0 : i32
    %c0_i32_0 = arith.constant 0 : i32
    return %c0_i32, %arg1 : i32, i32
  }
  func.func @transform_3(%arg0: i32, %arg1: i32, %arg2: i32) -> (i32, i32) {
    %c0_i32 = arith.constant 0 : i32
    return %arg0, %arg1 : i32, i32
  }
}

</mosaic_0001>

<llo_original>
// kernel: multi_head_classifier_forward.1
$region0: #{multi_head_classifier_forward.1}
  #allocation0 [shape = 'u32[]', space=smem, size = 0x4, offset = 0x4, fixed_abs, tag = 'smem constant byte address 0x4 - core index']
  #allocation1 [shape = 'u32[144,128]{1,0:T(1,128)}', space=vmem, size = 0x12000, scoped, tag = 'internal scratch']
  #allocation2 [shape = 'f32[8,128]{1,0:T(8,128)}', space=vmem, size = 0x1000, scoped, tag = 'scratch operand']
  %s0 = inlined_call_operand.vmem [shape: bf16[8,128], index: 0, kind: input, shape index: {}]
  %s1 = inlined_call_operand.vmem [shape: bf16[128,128], index: 1, kind: input, shape index: {}]
  %s2 = inlined_call_operand.vmem [shape: f32[1,128], index: 2, kind: input, shape index: {}]
  %s3 = inlined_call_operand.vmem [shape: f32[8,128], index: 3, kind: output, shape index: {}]
  %s4 = sld [smem:[#allocation0]]
  $region30: #{multi_head_classifier_forward.1} parent=0
    _
  %s6 = ssub.s32 1, %s4
  %s7 = scalar_select 0, %s6, %s4
  // Predicated region
  $region2: #{multi_head_classifier_forward.1} parent=0 // pred_check
    _
  $region3: #{multi_head_classifier_forward.1} parent=0 // pred_check_branch
    %9 = sbr.rel (0) target = $region5
  $region4: #{multi_head_classifier_forward.1} parent=0 // pred_region
    _
  $region5: #{multi_head_classifier_forward.1} parent=0 // pred_fallthru
    _
  // Predicated region
  $region6: #{multi_head_classifier_forward.1} parent=0 // pred_check
    _
  $region7: #{multi_head_classifier_forward.1} parent=0 // pred_check_branch
    %11 = sbr.rel (0) target = $region9
  $region8: #{multi_head_classifier_forward.1} parent=0 // pred_region
    _
  $region9: #{multi_head_classifier_forward.1} parent=0 // pred_fallthru
    _
  // Predicated region
  $region10: #{multi_head_classifier_forward.1} parent=0 // pred_check
    _
  $region11: #{multi_head_classifier_forward.1} parent=0 // pred_check_branch
    %13 = sbr.rel (0) target = $region13
  $region12: #{multi_head_classifier_forward.1} parent=0 // pred_region
    _
  $region13: #{multi_head_classifier_forward.1} parent=0 // pred_fallthru
    _
  %p15 = scmp.eq.s32.totalorder 0, 0
  // Predicated region
  $region14: #{multi_head_classifier_forward.1} parent=0 // pred_check
    %p16 = pneg %p15
  $region15: #{multi_head_classifier_forward.1} parent=0 // pred_check_branch
    %18 = sbr.rel (%p16) target = $region17
  $region16: #{multi_head_classifier_forward.1} parent=0 // pred_region
    %19 = vst [vmem:[#allocation2] sm:$0xff] 0.0
  $region17: #{multi_head_classifier_forward.1} parent=0 // pred_fallthru
    _
  %v20 = vld [vmem:[#allocation2] sm:$0xff]
  %v21 = vld [vmem:[%s0] sm:$0xf]
  %v22 = vld [vmem:[%s1] sm:$0xf]
  %v23 = vld [vmem:[%s1 + $0x4] sm:$0xf]
  %v24 = vld [vmem:[%s1 + $0x8] sm:$0xf]
  %v25 = vld [vmem:[%s1 + $0xc] sm:$0xf]
  %v26 = vld [vmem:[%s1 + $0x10] sm:$0xf]
  %v27 = vld [vmem:[%s1 + $0x14] sm:$0xf]
  %v28 = vld [vmem:[%s1 + $0x18] sm:$0xf]
  %v29 = vld [vmem:[%s1 + $0x1c] sm:$0xf]
  %v30 = vld [vmem:[%s1 + $0x20] sm:$0xf]
  %v31 = vld [vmem:[%s1 + $0x24] sm:$0xf]
  %v32 = vld [vmem:[%s1 + $0x28] sm:$0xf]
  %v33 = vld [vmem:[%s1 + $0x2c] sm:$0xf]
  %v34 = vld [vmem:[%s1 + $0x30] sm:$0xf]
  %v35 = vld [vmem:[%s1 + $0x34] sm:$0xf]
  %v36 = vld [vmem:[%s1 + $0x38] sm:$0xf]
  %v37 = vld [vmem:[%s1 + $0x3c] sm:$0xf]
  %v54 = vunpack.c.l.b16 %v22
  %v55 = vunpack.c.l.b16 %v23
  %v56 = vunpack.c.l.b16 %v24
  %v57 = vunpack.c.l.b16 %v25
  %v58 = vunpack.c.l.b16 %v26
  %v59 = vunpack.c.l.b16 %v27
  %v60 = vunpack.c.l.b16 %v28
  %v61 = vunpack.c.l.b16 %v29
  %v62 = vunpack.c.l.b16 %v30
  %v63 = vunpack.c.l.b16 %v31
  %v64 = vunpack.c.l.b16 %v32
  %v65 = vunpack.c.l.b16 %v33
  %v66 = vunpack.c.l.b16 %v34
  %v67 = vunpack.c.l.b16 %v35
  %v68 = vunpack.c.l.b16 %v36
  %v69 = vunpack.c.l.b16 %v37
  %v70 = vpack.c.b16 %v55, %v54
  %v71 = vpack.c.b16 %v57, %v56
  %v72 = vpack.c.b16 %v59, %v58
  %v73 = vpack.c.b16 %v61, %v60
  %v74 = vpack.c.b16 %v63, %v62
  %v75 = vpack.c.b16 %v65, %v64
  %v76 = vpack.c.b16 %v67, %v66
  %v77 = vpack.c.b16 %v69, %v68
  %86 = vmatprep.subr.bf16.mxu0 0
  %87 = vmatpush1.bf16.msra.mxu0 %v77
  %88 = vmatprep.subr.bf16.mxu0 0
  %89 = vmatpush1.bf16.msra.mxu0 %v76
  %90 = vmatprep.subr.bf16.mxu0 0
  %91 = vmatpush1.bf16.msra.mxu0 %v75
  %92 = vmatprep.subr.bf16.mxu0 0
  %93 = vmatpush1.bf16.msra.mxu0 %v74
  %94 = vmatprep.subr.bf16.mxu0 0
  %95 = vmatpush1.bf16.msra.mxu0 %v73
  %96 = vmatprep.subr.bf16.mxu0 0
  %97 = vmatpush1.bf16.msra.mxu0 %v72
  %98 = vmatprep.subr.bf16.mxu0 0
  %99 = vmatpush1.bf16.msra.mxu0 %v71
  %100 = vmatprep.subr.bf16.mxu0 0
  %101 = vmatpush1.bf16.msra.mxu0 %v70
  %102 = vmatprep.subr.bf16.mxu0 0
  %103 = vmatpush2.bf16.msra.mxu0 0
  %104 = vmatprep.subr.bf16.mxu0 0
  %105 = vmatpush2.bf16.msra.mxu0 0
  %106 = vmatprep.subr.bf16.mxu0 0
  %107 = vmatpush2.bf16.msra.mxu0 0
  %108 = vmatprep.subr.bf16.mxu0 0
  %109 = vmatpush2.bf16.msra.mxu0 0
  %110 = vmatprep.subr.bf16.mxu0 0
  %111 = vmatpush2.bf16.msra.mxu0 0
  %112 = vmatprep.subr.bf16.mxu0 0
  %113 = vmatpush2.bf16.msra.mxu0 0
  %114 = vmatprep.subr.bf16.mxu0 0
  %115 = vmatpush2.bf16.msra.mxu0 0
  %116 = vmatprep.subr.bf16.mxu0 0
  %117 = vmatpush2.bf16.msra.mxu0 0
  %118 = vmatprep.mubr.bf16.mxu0 0
  %119 = vmatmul.mubr.bf16.gmra.mxu0 %v21
  %v120 = vpop.f32.mrf.mxu0
  %v121 = vadd.f32 0.0, %v120
  %v122 = vpop.f32.mrf.mxu0
  %v123 = vpop.f32.mrf.mxu0
  %v124 = vpop.f32.mrf.mxu0
  %125 = vdwg.mxu0
  %v126 = vadd.f32 %v20, %v121
  %127 = vst [vmem:[#allocation2] sm:$0xff] %v126
  // Predicated region
  $region18: #{multi_head_classifier_forward.1} parent=0 // pred_check
    %p128 = pneg %p15
  $region19: #{multi_head_classifier_forward.1} parent=0 // pred_check_branch
    %130 = sbr.rel (%p128) target = $region21
  $region20: #{multi_head_classifier_forward.1} parent=0 // pred_region
    %v131 = vld [vmem:[#allocation2] sm:$0xff]
    %v132 = vld [vmem:[%s2] sm:$0x1]
    %v134 = vlaneseq
    %v135 = vshrl.u32 %v134, 7
    %v136 = vsub.s32 0, %v135
    %v137 = vrot.slane %v132, %v136
    %v139 = vadd.f32 %v131, %v137
    %140 = vst [vmem:[%s3] sm:$0xff] %v139
  $region21: #{multi_head_classifier_forward.1} parent=0 // pred_fallthru
    _
  // Predicated region
  $region22: #{multi_head_classifier_forward.1} parent=0 // pred_check
    _
  $region23: #{multi_head_classifier_forward.1} parent=0 // pred_check_branch
    %142 = sbr.rel (0) target = $region25
  $region24: #{multi_head_classifier_forward.1} parent=0 // pred_region
    _
  $region25: #{multi_head_classifier_forward.1} parent=0 // pred_fallthru
    _
  // Predicated region
  $region26: #{multi_head_classifier_forward.1} parent=0 // pred_check
    _
  $region27: #{multi_head_classifier_forward.1} parent=0 // pred_check_branch
    %144 = sbr.rel (0) target = $region29
  $region28: #{multi_head_classifier_forward.1} parent=0 // pred_region
    _
  $region29: #{multi_head_classifier_forward.1} parent=0 // pred_fallthru
    _

</llo_original>
